<compile_context>
chip_gen: v7x
topology: tpu7x:2x2x1
jax: 0.10.0
libtpu: 0.0.40
codegen_flags: <defaults>
</compile_context>

<pallas_src>
import math
import jax
import jax.numpy as jnp
from jax import lax
from jax.experimental import pallas as pl
from jax.experimental.pallas import tpu as pltpu


def _round_up(x, m):
    return ((x + m - 1) // m) * m


# ----------------------------------------------------------------------------
# Kernel 1: tiled Linear  y = x @ W + b
# (LoRA pre-merged into W in the wrapper: W_eff = W + A @ B, mathematically
#  identical to x @ W + b + (x @ A) @ B for the forward pass.)
# ----------------------------------------------------------------------------
def _linear_bias_kernel(x_ref, w_ref, b_ref, o_ref):
    # Operands stay in their input dtype (bf16 is the fast path on real
    # workloads); the MXU accumulates in f32 via preferred_element_type.
    acc = jnp.dot(x_ref[...], w_ref[...], preferred_element_type=jnp.float32)
    o_ref[...] = (acc + b_ref[...]).astype(o_ref.dtype)


def linear_bias(x2d, w, b, *, tile_m=128, tile_n=None):
    """x2d: (M, Din); w: (Din, Dout); b: (Dout,). Returns (M, Dout)."""
    M, Din = x2d.shape
    Dout = w.shape[1]

    # MXU-native row tiling (128 rows; 256 also fine on v6e/v7x).  Small-M
    # case: a single full-M tile rounded up to the 8-sublane granule.
    if M < tile_m:
        tile_m = _round_up(M, 8)
    Mp = _round_up(M, tile_m)
    if Mp != M:
        x2d = jnp.pad(x2d, ((0, Mp - M), (0, 0)))

    # Column tiling keeps the resident weight block bounded (v7x: 64 MiB VMEM).
    if tile_n is None:
        tile_n = 512 if (Dout > 512 and Dout % 512 == 0) else Dout

    b2d = b.reshape(1, Dout)
    itemsize = jnp.dtype(x2d.dtype).itemsize
    cost = pl.CostEstimate(
        flops=2 * Mp * Din * Dout,
        transcendentals=0,
        bytes_accessed=itemsize * (Mp * Din + Din * Dout + Dout + Mp * Dout),
    )

    out = pl.pallas_call(
        _linear_bias_kernel,
        out_shape=jax.ShapeDtypeStruct((Mp, Dout), x2d.dtype),
        grid_spec=pltpu.PrefetchScalarGridSpec(
            num_scalar_prefetch=0,
            grid=(Mp // tile_m, Dout // tile_n),
            in_specs=[
                pl.BlockSpec((tile_m, Din), lambda i, j: (i, 0)),
                pl.BlockSpec((Din, tile_n), lambda i, j: (0, j)),
                pl.BlockSpec((1, tile_n), lambda i, j: (0, j)),
            ],
            out_specs=pl.BlockSpec((tile_m, tile_n), lambda i, j: (i, j)),
        ),
        compiler_params=pltpu.CompilerParams(
            dimension_semantics=("parallel", "parallel")),
        cost_estimate=cost,
    )(x2d, w, b2d)
    return out[:M] if Mp != M else out


# ----------------------------------------------------------------------------
# Kernel 2: scaled dot-product attention, one batch element per grid step.
# Heads are split in-kernel; the output block is a lane-dense (1, L, H*Dv)
# slab so there are no host-side head transposes and no masked partial stores
# per head.
# ----------------------------------------------------------------------------
def _make_attn_kernel(H, E, Dv, scale):
    def attn_kernel(q_ref, k_ref, v_ref, am_ref, km_ref, o_ref):
        q_all = q_ref[0]                      # (L, H*E)
        k_all = k_ref[0]                      # (S, H*E)
        v_all = v_ref[0]                      # (S, H*Dv)
        add_mask = am_ref[...] + km_ref[0]    # (L,S)+(1,S); hoisted out of head loop
        outs = []
        for h in range(H):                    # static unroll over heads
            q = q_all[:, h * E:(h + 1) * E]
            k = k_all[:, h * E:(h + 1) * E]
            v = v_all[:, h * Dv:(h + 1) * Dv]
            # Q @ K^T via dot_general contracting last dims (no K transpose).
            s = lax.dot_general(q, k, (((1,), (1,)), ((), ())),
                                preferred_element_type=jnp.float32) * scale
            s = s + add_mask
            m = jnp.max(s, axis=-1, keepdims=True)
            p = jnp.exp(s - m)
            denom = jnp.sum(p, axis=-1, keepdims=True)
            p = (p * pl.reciprocal(denom, approx=True)).astype(v.dtype)
            outs.append(jnp.dot(p, v, preferred_element_type=jnp.float32))
        # Single lane-dense store covering all heads.
        o_ref[0] = jnp.concatenate(outs, axis=-1).astype(o_ref.dtype)
    return attn_kernel


def multihead_attention(q, k, v, attn_mask_add, key_len_add, n_heads):
    """q: (N,L,H*E)  k: (N,S,H*E)  v: (N,S,H*Dv)
       attn_mask_add: (L,S) additive float mask (0 = attend, -inf = blocked)
       key_len_add:   (N,S) additive float mask for key lengths
       returns (N, L, H*Dv)."""
    N, L, HE = q.shape
    _, S, HDv = v.shape
    H = n_heads
    E = HE // H
    Dv = HDv // H
    scale = 1.0 / math.sqrt(E)

    km = key_len_add.reshape(N, 1, S)
    itemsize = jnp.dtype(q.dtype).itemsize
    cost = pl.CostEstimate(
        flops=2 * N * H * L * S * (E + Dv),
        transcendentals=N * H * L * S,
        bytes_accessed=itemsize * (N * L * HE + N * S * HE + N * S * HDv + N * L * HDv)
        + 4 * (L * S + N * S),
    )

    # TODO(synk): for long S, switch to a flash-style (batch, kv-tile) grid with
    # online-softmax scratch so K/V need not be fully resident in VMEM.
    return pl.pallas_call(
        _make_attn_kernel(H, E, Dv, scale),
        out_shape=jax.ShapeDtypeStruct((N, L, HDv), q.dtype),
        grid_spec=pltpu.PrefetchScalarGridSpec(
            num_scalar_prefetch=0,
            grid=(N,),
            in_specs=[
                pl.BlockSpec((1, L, HE), lambda b: (b, 0, 0)),
                pl.BlockSpec((1, S, HE), lambda b: (b, 0, 0)),
                pl.BlockSpec((1, S, HDv), lambda b: (b, 0, 0)),
                pl.BlockSpec((L, S), lambda b: (0, 0)),
                pl.BlockSpec((1, 1, S), lambda b: (b, 0, 0)),
            ],
            out_specs=pl.BlockSpec((1, L, HDv), lambda b: (b, 0, 0)),
        ),
        compiler_params=pltpu.CompilerParams(dimension_semantics=("parallel",)),
        cost_estimate=cost,
    )(q, k, v, attn_mask_add, km)


# ----------------------------------------------------------------------------
# AttentionLayer_LoRA forward
# ----------------------------------------------------------------------------
def attention_layer_lora_forward(params, queries, keys, values,
                                 attn_mask_add, key_len_add, n_heads):
    N, L, D = queries.shape
    _, S, _ = keys.shape
    H = n_heads

    # Pre-merge the LoRA adapters into the projection weights once per call
    # (can be cached for inference):  x @ W + b + (x @ A) @ B == x @ (W + A@B) + b.
    wq = params["Wq"] + params["Aq"] @ params["Bq"]
    wk = params["Wk"] + params["Ak"] @ params["Bk"]
    wv = params["Wv"] + params["Av"] @ params["Bv"]
    wo = params["Wo"] + params["Ao"] @ params["Bo"]

    # Projections — q/k/v stay in (N, T, H*E) layout; heads are split inside
    # the attention kernel so no host-side transposes are needed.
    q = linear_bias(queries.reshape(N * L, D), wq, params["bq"]).reshape(N, L, -1)
    k = linear_bias(keys.reshape(N * S, D), wk, params["bk"]).reshape(N, S, -1)
    v = linear_bias(values.reshape(N * S, D), wv, params["bv"]).reshape(N, S, -1)

    new_values = multihead_attention(q, k, v, attn_mask_add, key_len_add, H)  # (N,L,H*Dv)

    return linear_bias(new_values.reshape(N * L, -1),
                       wo, params["bo"]).reshape(N, L, D)


# ----------------------------------------------------------------------------
# Pure-JAX reference (un-merged LoRA path, for correctness checking only)
# ----------------------------------------------------------------------------
def reference_forward(params, queries, keys, values,
                      attn_mask_add, key_len_add, n_heads):
    N, L, D = queries.shape
    _, S, _ = keys.shape
    H = n_heads

    def lin_lora(x, w, b, a, bm):
        return x @ w + b + (x @ a) @ bm

    q = lin_lora(queries, params["Wq"], params["bq"], params["Aq"], params["Bq"]).reshape(N, L, H, -1)
    k = lin_lora(keys, params["Wk"], params["bk"], params["Ak"], params["Bk"]).reshape(N, S, H, -1)
    v = lin_lora(values, params["Wv"], params["bv"], params["Av"], params["Bv"]).reshape(N, S, H, -1)

    E = q.shape[-1]
    scale = 1.0 / math.sqrt(E)
    s = jnp.einsum("nlhe,nshe->nhls", q, k) * scale
    s = s + attn_mask_add[None, None] + key_len_add[:, None, None]
    A = jax.nn.softmax(s, axis=-1)
    nv = jnp.einsum("nhls,nshd->nlhd", A, v).reshape(N, L, -1)
    return lin_lora(nv, params["Wo"], params["bo"], params["Ao"], params["Bo"])


# ----------------------------------------------------------------------------
# Parameter construction (deterministic, in-script)
# ----------------------------------------------------------------------------
def make_params(key, d_model, n_heads, r):
    d_keys = d_model // n_heads
    d_values = d_model // n_heads
    ks = jax.random.split(key, 16)
    scale = 0.05

    def rnd(k, shape):
        return (jax.random.normal(k, shape) * scale).astype(jnp.float32)

    params = {
        # main projections, stored as (in, out)
        "Wq": rnd(ks[0], (d_model, d_keys * n_heads)),
        "bq": rnd(ks[1], (d_keys * n_heads,)),
        "Wk": rnd(ks[2], (d_model, d_keys * n_heads)),
        "bk": rnd(ks[3], (d_keys * n_heads,)),
        "Wv": rnd(ks[4], (d_model, d_values * n_heads)),
        "bv": rnd(ks[5], (d_values * n_heads,)),
        "Wo": rnd(ks[6], (d_values * n_heads, d_model)),
        "bo": rnd(ks[7], (d_model,)),
        # LoRA adapters (down (d_model, r), up (r, d_model)); initialized
        # non-zero so the LoRA path is actually exercised (the PyTorch module
        # zero-inits the up-projection, which would make it a no-op).
        "Aq": rnd(ks[8], (d_model, r)),  "Bq": rnd(ks[9], (r, d_model)),
        "Ak": rnd(ks[10], (d_model, r)), "Bk": rnd(ks[11], (r, d_model)),
        "Av": rnd(ks[12], (d_model, r)), "Bv": rnd(ks[13], (r, d_model)),
        "Ao": rnd(ks[14], (d_model, r)), "Bo": rnd(ks[15], (r, d_model)),
    }
    return params


if __name__ == "__main__":
    d_model = 32
    n_heads = 4
    r = 4
    N, L, S = 2, 8, 8

    key = jax.random.PRNGKey(0)
    kp, kq, kk, kv = jax.random.split(key, 4)

    params = make_params(kp, d_model, n_heads, r)
    queries = jax.random.normal(kq, (N, L, d_model), dtype=jnp.float32)
    keys = jax.random.normal(kk, (N, S, d_model), dtype=jnp.float32)
    values = jax.random.normal(kv, (N, S, d_model), dtype=jnp.float32)

    # Full masks (everything visible) as additive float masks.
    attn_mask_add = jnp.zeros((L, S), dtype=jnp.float32)
    key_len_add = jnp.zeros((N, S), dtype=jnp.float32)

    out = attention_layer_lora_forward(params, queries, keys, values,
                                       attn_mask_add, key_len_add, n_heads)
    out = jax.block_until_ready(out)

    ref = reference_forward(params, queries, keys, values,
                            attn_mask_add, key_len_add, n_heads)

    assert out.shape == (N, L, d_model)
    # Tolerance accounts for the approximate (EUP) reciprocal in the softmax.
    assert jnp.allclose(out, ref, atol=1e-3, rtol=1e-3), "mismatch vs reference"

    print("KERNEL_OK")
</pallas_src>

<mosaic_0001>
module attributes {stable_mosaic.version = 11 : i64} {
  func.func @_linear_bias_kernel(%arg0: i32, %arg1: i32, %arg2: memref<16x32xf32, #tpu.memory_space<vmem>>, %arg3: memref<32x32xf32, #tpu.memory_space<vmem>>, %arg4: memref<1x32xf32, #tpu.memory_space<vmem>>, %arg5: memref<16x32xf32, #tpu.memory_space<vmem>>) attributes {dimension_semantics = [#tpu.dimension_semantics<parallel>, #tpu.dimension_semantics<parallel>], iteration_bounds = array<i64: 1, 1>, scalar_prefetch = 0 : i64, scratch_operands = 0 : i64, tpu.core_type = #tpu.core_type<tc>, window_params = [{transform_indices = @transform_0, window_bounds = array<i64: 16, 32>}, {transform_indices = @transform_1, window_bounds = array<i64: 32, 32>}, {transform_indices = @transform_2, window_bounds = array<i64: 1, 32>}, {transform_indices = @transform_3, window_bounds = array<i64: 16, 32>}]} {
    %c0 = arith.constant 0 : index
    %c0_0 = arith.constant 0 : index
    %0 = vector.load %arg2[%c0, %c0_0] : memref<16x32xf32, #tpu.memory_space<vmem>>, vector<16x32xf32>
    %c0_1 = arith.constant 0 : index
    %c0_2 = arith.constant 0 : index
    %1 = vector.load %arg3[%c0_1, %c0_2] : memref<32x32xf32, #tpu.memory_space<vmem>>, vector<32x32xf32>
    %cst = arith.constant dense<0.000000e+00> : vector<16x32xf32>
    %2 = tpu.matmul %0, %1, %cst {dimension_numbers = #tpu.dot_dimension_numbers<[1], [0], [0], [1], [0, 0, 1, 1], [], []>} : vector<16x32xf32>, vector<32x32xf32>, vector<16x32xf32> -> vector<16x32xf32>
    %c0_3 = arith.constant 0 : index
    %c0_4 = arith.constant 0 : index
    %3 = vector.load %arg4[%c0_3, %c0_4] : memref<1x32xf32, #tpu.memory_space<vmem>>, vector<1x32xf32>
    %4 = vector.broadcast %3 : vector<1x32xf32> to vector<16x32xf32>
    %5 = arith.addf %2, %4 : vector<16x32xf32>
    %c0_5 = arith.constant 0 : index
    %c0_6 = arith.constant 0 : index
    %6 = vector.load %arg5[%c0_5, %c0_6] : memref<16x32xf32, #tpu.memory_space<vmem>>, vector<16x32xf32>
    tpu.vector_store %arg5[%c0_5, %c0_6], %5 {strides = array<i32>} : memref<16x32xf32, #tpu.memory_space<vmem>>, vector<16x32xf32>,
    return
  }
  func.func @transform_0(%arg0: i32, %arg1: i32) -> (i32, i32) {
    %c0_i32 = arith.constant 0 : i32
    %c0_i32_0 = arith.constant 0 : i32
    return %arg0, %c0_i32 : i32, i32
  }
  func.func @transform_1(%arg0: i32, %arg1: i32) -> (i32, i32) {
    %c0_i32 = arith.constant 0 : i32
    %c0_i32_0 = arith.constant 0 : i32
    return %c0_i32, %arg1 : i32, i32
  }
  func.func @transform_2(%arg0: i32, %arg1: i32) -> (i32, i32) {
    %c0_i32 = arith.constant 0 : i32
    %c0_i32_0 = arith.constant 0 : i32
    return %c0_i32, %arg1 : i32, i32
  }
  func.func @transform_3(%arg0: i32, %arg1: i32) -> (i32, i32) {
    %c0_i32 = arith.constant 0 : i32
    return %arg0, %arg1 : i32, i32
  }
}

</mosaic_0001>

<llo_original>
// kernel: tpu_custom_call.1
$region0: #{tpu_custom_call.1}
  #allocation0 [shape = 'u32[]', space=smem, size = 0x4, offset = 0x4, fixed_abs, tag = 'smem constant byte address 0x4 - core index']
  #allocation1 [shape = 'u32[144,128]{1,0:T(1,128)}', space=vmem, size = 0x12000, scoped, tag = 'internal scratch']
  %s0 = inlined_call_operand.hbm [shape: f32[16,32], index: 0, kind: input, shape index: {}]
  %s1 = inlined_call_operand.hbm [shape: f32[32,32], index: 1, kind: input, shape index: {}]
  %s2 = inlined_call_operand.vmem [shape: f32[1,32], index: 2, kind: input, shape index: {}]
  %s3 = inlined_call_operand.hbm [shape: f32[16,32], index: 3, kind: output, shape index: {}]
  %s4 = sld [smem:[#allocation0]]
  $region30: #{tpu_custom_call.1} parent=0
    _
  %s6 = ssub.s32 1, %s4
  %s7 = scalar_select 0, %s6, %s4
  $region1: #{tpu_custom_call.1} parent=0
    #allocation2 [shape = 'u8[8192]{0}', space=vmem, size = 0x2000, scoped, tag = 'input window, operand 0, single buffered']
    #allocation3 [shape = 's32[1]{0}', space=sflag, size = 0x4, scoped, tag = 'scoped memory for tpu_custom_call.1']
    #allocation4 [shape = 's32[1]{0}', space=sflag, size = 0x4, scoped, tag = 'scoped memory for tpu_custom_call.1']
    #allocation5 [shape = 'u8[16384]{0}', space=vmem, size = 0x4000, scoped, tag = 'input window, operand 1, single buffered']
    #allocation6 [shape = 's32[1]{0}', space=sflag, size = 0x4, scoped, tag = 'scoped memory for tpu_custom_call.1']
    #allocation7 [shape = 'u8[8192]{0}', space=vmem, size = 0x2000, scoped, tag = 'output window, operand 0, single buffered']
    %8 = vsyncpa [#allocation3], 0
    %9 = vsyncpa [#allocation6], 0
    %10 = vsyncpa [#allocation4], 0
    // Predicated region
    $region2: #{tpu_custom_call.1} parent=1 // pred_check
      _
    $region3: #{tpu_custom_call.1} parent=1 // pred_check_branch
      %12 = sbr.rel (0) target = $region5
    $region4: #{tpu_custom_call.1} parent=1 // pred_region
      %s14 = ssub.s32 256, 256
      %15 = vsyncadd [#allocation3], %s14
      %s16 = sshll.u32 [#allocation2], 4
      %s17 = int_to_ptr.vmem [resolvable:$true] %s16
      %22 = dma.hbm_to_vmem [thread:$0]  %s0, 256, %s17, [#allocation3], 128, 128, 8
    $region5: #{tpu_custom_call.1} parent=1 // pred_fallthru
      _
    // Predicated region
    $region6: #{tpu_custom_call.1} parent=1 // pred_check
      _
    $region7: #{tpu_custom_call.1} parent=1 // pred_check_branch
      %24 = sbr.rel (0) target = $region9
    $region8: #{tpu_custom_call.1} parent=1 // pred_region
      %s26 = ssub.s32 512, 512
      %27 = vsyncadd [#allocation6], %s26
      %s28 = sshll.u32 [#allocation5], 4
      %s29 = int_to_ptr.vmem [resolvable:$true] %s28
      %34 = dma.hbm_to_vmem [thread:$0]  %s1, 512, %s29, [#allocation6], 128, 128, 8
    $region9: #{tpu_custom_call.1} parent=1 // pred_fallthru
      _
    // Predicated region
    $region10: #{tpu_custom_call.1} parent=1 // pred_check
      _
    $region11: #{tpu_custom_call.1} parent=1 // pred_check_branch
      %36 = sbr.rel (0) target = $region13
    $region12: #{tpu_custom_call.1} parent=1 // pred_region
      _
    $region13: #{tpu_custom_call.1} parent=1 // pred_fallthru
      _
    // Predicated region
    $region14: #{tpu_custom_call.1} parent=1 // pred_check
      _
    $region15: #{tpu_custom_call.1} parent=1 // pred_check_branch
      %38 = sbr.rel (0) target = $region17
    $region16: #{tpu_custom_call.1} parent=1 // pred_region
      %39 = dma.done [#allocation3], 256
    $region17: #{tpu_custom_call.1} parent=1 // pred_fallthru
      _
    // Predicated region
    $region18: #{tpu_custom_call.1} parent=1 // pred_check
      _
    $region19: #{tpu_custom_call.1} parent=1 // pred_check_branch
      %41 = sbr.rel (0) target = $region21
    $region20: #{tpu_custom_call.1} parent=1 // pred_region
      %42 = dma.done [#allocation6], 512
    $region21: #{tpu_custom_call.1} parent=1 // pred_fallthru
      _
    %v43 = vld [vmem:[#allocation2] sm:$0xff]
    %v44 = vld [vmem:[#allocation2 + $0x8] sm:$0xff]
    %v45 = vld [vmem:[#allocation5] sm:$0xff]
    %v46 = vld [vmem:[#allocation5 + $0x8] sm:$0xff]
    %v47 = vld [vmem:[#allocation5 + $0x10] sm:$0xff]
    %v48 = vld [vmem:[#allocation5 + $0x18] sm:$0xff]
    %v49 = vld [vmem:[%s2] sm:$0x1]
    %v51 = vlaneseq
    %v52 = vshrl.u32 %v51, 7
    %v53 = vsub.s32 0, %v52
    %v54 = vrot.slane %v49, %v53
    %vm56 = vcmask 261120
    %v58 = vsel %vm56, %v43, 0
    %v61 = vsel %vm56, %v44, 0
    %63 = vmatprep.subr.mxu0 0.0
    %64 = vmatpush1.msra.mxu0 %v45
    %65 = vmatprep.subr.mxu0 0.0
    %66 = vmatpush1.msra.mxu0 %v46
    %67 = vmatprep.subr.mxu0 0.0
    %68 = vmatpush1.msra.mxu0 %v47
    %69 = vmatprep.subr.mxu0 0.0
    %70 = vmatpush1.msra.mxu0 %v48
    %71 = vmatprep.subr.mxu0 0.0
    %72 = vmatpush1.msra.mxu0 0.0
    %73 = vmatprep.subr.mxu0 0.0
    %74 = vmatpush1.msra.mxu0 0.0
    %75 = vmatprep.subr.mxu0 0.0
    %76 = vmatpush1.msra.mxu0 0.0
    %77 = vmatprep.subr.mxu0 0.0
    %78 = vmatpush1.msra.mxu0 0.0
    %79 = vmatprep.subr.mxu0 0.0
    %80 = vmatpush1.msra.mxu0 0.0
    %81 = vmatprep.subr.mxu0 0.0
    %82 = vmatpush1.msra.mxu0 0.0
    %83 = vmatprep.subr.mxu0 0.0
    %84 = vmatpush1.msra.mxu0 0.0
    %85 = vmatprep.subr.mxu0 0.0
    %86 = vmatpush1.msra.mxu0 0.0
    %87 = vmatprep.subr.mxu0 0.0
    %88 = vmatpush1.msra.mxu0 0.0
    %89 = vmatprep.subr.mxu0 0.0
    %90 = vmatpush1.msra.mxu0 0.0
    %91 = vmatprep.subr.mxu0 0.0
    %92 = vmatpush1.msra.mxu0 0.0
    %93 = vmatprep.subr.mxu0 0.0
    %94 = vmatpush1.msra.mxu0 0.0
    %95 = vmatprep.subr.mxu0 0.0
    %96 = vmatpush1.msra.mxu0 0.0
    %97 = vmatprep.subr.mxu0 0.0
    %98 = vmatpush1.msra.mxu0 0.0
    %99 = vmatprep.subr.mxu0 0.0
    %100 = vmatpush1.msra.mxu0 0.0
    %101 = vmatprep.subr.mxu0 0.0
    %102 = vmatpush1.msra.mxu0 0.0
    %103 = vmatprep.subr.mxu0 0.0
    %104 = vmatpush1.msra.mxu0 0.0
    %105 = vmatprep.subr.mxu0 0.0
    %106 = vmatpush1.msra.mxu0 0.0
    %107 = vmatprep.subr.mxu0 0.0
    %108 = vmatpush1.msra.mxu0 0.0
    %109 = vmatprep.subr.mxu0 0.0
    %110 = vmatpush1.msra.mxu0 0.0
    %111 = vmatprep.subr.mxu0 0.0
    %112 = vmatpush1.msra.mxu0 0.0
    %113 = vmatprep.subr.mxu0 0.0
    %114 = vmatpush1.msra.mxu0 0.0
    %115 = vmatprep.subr.mxu0 0.0
    %116 = vmatpush1.msra.mxu0 0.0
    %117 = vmatprep.subr.mxu0 0.0
    %118 = vmatpush1.msra.mxu0 0.0
    %119 = vmatprep.subr.mxu0 0.0
    %120 = vmatpush1.msra.mxu0 0.0
    %121 = vmatprep.subr.mxu0 0.0
    %122 = vmatpush1.msra.mxu0 0.0
    %123 = vmatprep.subr.mxu0 0.0
    %124 = vmatpush1.msra.mxu0 0.0
    %125 = vmatprep.subr.mxu0 0.0
    %126 = vmatpush1.msra.mxu0 0.0
    %127 = vmatprep.mubr.f32.mxu0 0.0
    %128 = vmatmul.mubr.f32.gmra.mrb[0].mxu0 %v58
    %v129 = vpop.f32.mrb[0].mxu0
    %v130 = vadd.f32 %v54, %v129
    %v131 = vpop.f32.mrb[0].mxu0
    %132 = vmatprep.mubr.f32.mxu0 0.0
    %133 = vmatmul.mubr.f32.gmra.mrb[0].mxu0 %v61
    %v134 = vpop.f32.mrb[0].mxu0
    %v135 = vadd.f32 %v54, %v134
    %v136 = vpop.f32.mrb[0].mxu0
    %137 = vdwg.mxu0
    %138 = vst.msk [vmem:[#allocation7] sm:$0xff] %vm56, %v130
    %139 = vst.msk [vmem:[#allocation7 + $0x8] sm:$0xff] %vm56, %v135
    // Predicated region
    $region22: #{tpu_custom_call.1} parent=1 // pred_check
      _
    $region23: #{tpu_custom_call.1} parent=1 // pred_check_branch
      %141 = sbr.rel (0) target = $region25
    $region24: #{tpu_custom_call.1} parent=1 // pred_region
      %s143 = ssub.s32 256, 256
      %144 = vsyncadd [#allocation4], %s143
      %s145 = sshll.u32 [#allocation7], 4
      %s146 = int_to_ptr.vmem [resolvable:$true] %s145
      %151 = dma.vmem_to_hbm [thread:$0]  %s146, 256, %s3, [#allocation4], 128, 128, 8
    $region25: #{tpu_custom_call.1} parent=1 // pred_fallthru
      _
    // Predicated region
    $region26: #{tpu_custom_call.1} parent=1 // pred_check
      _
    $region27: #{tpu_custom_call.1} parent=1 // pred_check_branch
      %153 = sbr.rel (0) target = $region29
    $region28: #{tpu_custom_call.1} parent=1 // pred_region
      %154 = dma.done [#allocation4], 256
    $region29: #{tpu_custom_call.1} parent=1 // pred_fallthru
      _
    %155 = vsyncpa [#allocation3], 1
    %156 = vsyncpa [#allocation6], 1
    %157 = vsyncpa [#allocation4], 1

</llo_original>
